<compile_context>
chip_gen: v6e
topology: v6e:2x2x1
jax: 0.10.0
libtpu: 0.0.40
codegen_flags: <defaults>
</compile_context>

<pallas_src>
import functools

import jax
import jax.numpy as jnp
from jax.experimental import pallas as pl
from jax.experimental.pallas import tpu as pltpu


def _hyperbolic_ffn_kernel(scale_ref, x_ref, wgu_ref, wdb_ref, o_ref, acc_ref):
    ki = pl.program_id(1)
    ti = wdb_ref.shape[0]                     # static intermediate tile size

    @pl.when(ki == 0)
    def _():
        acc_ref[...] = jnp.zeros_like(acc_ref)

    x = x_ref[...]                            # (tm, H), native dtype (resident across ki)

    # Fused gate+up projection: one (tm,H) x (H,2*ti) matmul, f32 accumulation.
    gu = jnp.dot(x, wgu_ref[...], preferred_element_type=jnp.float32)   # (tm, 2*ti)
    g = gu[:, :ti]
    u = gu[:, ti:]
    inter = (g * jax.nn.sigmoid(g)) * u       # SiLU(gate) * up, f32

    # Partial down projection, accumulated over I blocks in an f32 scratch.
    acc_ref[...] += jnp.dot(inter.astype(wdb_ref.dtype), wdb_ref[...],
                            preferred_element_type=jnp.float32)

    @pl.when(ki == pl.num_programs(1) - 1)
    def _():
        # direction = x / (||x|| + 1e-8)   (matches torch: norm + eps, not max)
        xf = x.astype(jnp.float32)
        norm = jnp.sqrt(jnp.sum(xf * xf, axis=-1, keepdims=True))
        direction = xf / (norm + 1e-8)
        out = acc_ref[...] * direction * scale_ref[0]
        o_ref[...] = out.astype(o_ref.dtype)


def _pick_tile(n, target, align):
    """Largest divisor of n that is <= target and a multiple of `align`.
    Falls back to n itself (a full-dim block always satisfies the tiling rules)."""
    for d in range(min(n, target), 0, -1):
        if n % d == 0 and d % align == 0:
            return d
    return n


@functools.partial(jax.jit, static_argnames=("tm", "ti"))
def hyperbolic_ffn(hidden_states, wg_t, wu_t, wd_t, scale, *, tm=256, ti=512):
    """hidden_states: [B, S, H]; wg_t/wu_t: [H, I]; wd_t: [I, H]; scale: [1].

    tm: row tile (MXU-sized, default 256).  ti: intermediate-dim tile
    (default 512; halve on v7x if VMEM-constrained at large H).
    """
    B, S, H = hidden_states.shape
    I = wg_t.shape[1]
    M = B * S

    tm_ = _pick_tile(M, tm, 8)       # sublane-aligned row tile (or full M)
    ti_ = _pick_tile(I, ti, 128)     # lane-aligned intermediate tile (or full I)
    KI = I // ti_

    x2d = hidden_states.reshape(M, H)

    # Pack gate/up into fused per-block slabs, and block the down projection,
    # so every weight block's last two dims are full axes of its packed array.
    wg_blk = wg_t.reshape(H, KI, ti_).transpose(1, 0, 2)     # (KI, H, ti)
    wu_blk = wu_t.reshape(H, KI, ti_).transpose(1, 0, 2)     # (KI, H, ti)
    wgu_blk = jnp.concatenate([wg_blk, wu_blk], axis=-1)     # (KI, H, 2*ti)
    wdb_blk = wd_t.reshape(KI, ti_, H)                       # (KI, ti, H)

    out2d = pl.pallas_call(
        _hyperbolic_ffn_kernel,
        out_shape=jax.ShapeDtypeStruct((M, H), hidden_states.dtype),
        grid_spec=pltpu.PrefetchScalarGridSpec(
            num_scalar_prefetch=0,
            grid=(M // tm_, KI),                              # I (reduction) axis last
            in_specs=[
                pl.BlockSpec(memory_space=pltpu.MemorySpace.SMEM),        # scale (scalar)
                pl.BlockSpec((tm_, H), lambda i, k: (i, 0)),              # x rows (resident over k)
                pl.BlockSpec((None, H, 2 * ti_), lambda i, k: (k, 0, 0)), # fused [Wg|Wu] block
                pl.BlockSpec((None, ti_, H), lambda i, k: (k, 0, 0)),     # Wd block
            ],
            out_specs=pl.BlockSpec((tm_, H), lambda i, k: (i, 0)),
            scratch_shapes=[pltpu.VMEM((tm_, H), jnp.float32)],           # f32 accumulator
        ),
        compiler_params=pltpu.CompilerParams(
            dimension_semantics=("parallel", "arbitrary"),
            vmem_limit_bytes=64 * 1024 * 1024,
        ),
    )(scale, x2d, wgu_blk, wdb_blk)

    return out2d.reshape(B, S, H)


def hyperbolic_ffn_ref(hidden_states, wg_t, wu_t, wd_t, scale):
    """Pure-JAX reference mirroring the PyTorch HyperbolicFFN.forward."""
    x = hidden_states.astype(jnp.float32)
    norm = jnp.sqrt(jnp.sum(x * x, axis=-1, keepdims=True))
    direction = x / (norm + 1e-8)
    g = x @ wg_t.astype(jnp.float32)
    u = x @ wu_t.astype(jnp.float32)
    inter = (g * jax.nn.sigmoid(g)) * u
    out = inter @ wd_t.astype(jnp.float32)
    return (out * direction * scale[0]).astype(hidden_states.dtype)


if __name__ == "__main__":
    # Small config: batch=2, seq=8, hidden=32, intermediate=64
    B, S, H, I = 2, 8, 32, 64

    key = jax.random.PRNGKey(0)
    kx, kg, ku, kd = jax.random.split(key, 4)

    hidden_states = jax.random.normal(kx, (B, S, H), dtype=jnp.float32)

    # Deterministic init: Linear weights ~ N(0, 0.02), scale = ones(1)
    # PyTorch Linear stores weight as [out, in]; we pre-transpose to [in, out].
    wg = 0.02 * jax.random.normal(kg, (I, H), dtype=jnp.float32)   # gate_proj.weight
    wu = 0.02 * jax.random.normal(ku, (I, H), dtype=jnp.float32)   # up_proj.weight
    wd = 0.02 * jax.random.normal(kd, (H, I), dtype=jnp.float32)   # down_proj.weight
    scale = jnp.ones((1,), dtype=jnp.float32)

    wg_t, wu_t, wd_t = wg.T, wu.T, wd.T   # glue: pre-transpose for row-major matmul

    out = hyperbolic_ffn(hidden_states, wg_t, wu_t, wd_t, scale)
    out = jax.block_until_ready(out)

    ref = hyperbolic_ffn_ref(hidden_states, wg_t, wu_t, wd_t, scale)
    assert out.shape == (B, S, H), out.shape
    assert jnp.allclose(out, ref, atol=2e-5, rtol=1e-4), \
        float(jnp.max(jnp.abs(out - ref)))

    print("KERNEL_OK")
</pallas_src>

<mosaic_0001>
module attributes {stable_mosaic.version = 11 : i64} {
  func.func @_hyperbolic_ffn_kernel(%arg0: i32, %arg1: i32, %arg2: memref<1xf32, #tpu.memory_space<smem>>, %arg3: memref<16x32xf32, #tpu.memory_space<vmem>>, %arg4: memref<1x32x128xf32, #tpu.memory_space<vmem>>, %arg5: memref<1x64x32xf32, #tpu.memory_space<vmem>>, %arg6: memref<16x32xf32, #tpu.memory_space<vmem>>, %arg7: memref<16x32xf32, #tpu.memory_space<vmem>>) attributes {dimension_semantics = [#tpu.dimension_semantics<parallel>, #tpu.dimension_semantics<arbitrary>], iteration_bounds = array<i64: 1, 1>, scalar_prefetch = 0 : i64, scratch_operands = 1 : i64, tpu.core_type = #tpu.core_type<tc>, window_params = [{transform_indices = @transform_0, window_bounds = array<i64: 1>}, {transform_indices = @transform_1, window_bounds = array<i64: 16, 32>}, {transform_indices = @transform_2, window_bounds = array<i64: 1, 32, 128>}, {transform_indices = @transform_3, window_bounds = array<i64: 1, 64, 32>}, {transform_indices = @transform_4, window_bounds = array<i64: 16, 32>}]} {
    %c0_i32 = arith.constant 0 : i32
    %0 = arith.cmpi eq, %arg1, %c0_i32 : i32
    %1 = arith.extui %0 : i1 to i32
    %c0_i32_0 = arith.constant 0 : i32
    %2 = arith.cmpi ne, %1, %c0_i32_0 : i32
    scf.if %2 {
      %cst_16 = arith.constant 0.000000e+00 : f32
      %25 = vector.broadcast %cst_16 : f32 to vector<16x32xf32>
      %c0_17 = arith.constant 0 : index
      %c0_18 = arith.constant 0 : index
      %26 = vector.load %arg7[%c0_17, %c0_18] : memref<16x32xf32, #tpu.memory_space<vmem>>, vector<16x32xf32>
      tpu.vector_store %arg7[%c0_17, %c0_18], %25 {strides = array<i32>} : memref<16x32xf32, #tpu.memory_space<vmem>>, vector<16x32xf32>,
    } else {
    }
    %c0 = arith.constant 0 : index
    %c0_1 = arith.constant 0 : index
    %3 = vector.load %arg3[%c0, %c0_1] : memref<16x32xf32, #tpu.memory_space<vmem>>, vector<16x32xf32>
    %c0_2 = arith.constant 0 : index
    %c0_3 = arith.constant 0 : index
    %c0_4 = arith.constant 0 : index
    %4 = vector.load %arg4[%c0_2, %c0_3, %c0_4] : memref<1x32x128xf32, #tpu.memory_space<vmem>>, vector<1x32x128xf32>
    %5 = vector.shape_cast %4 : vector<1x32x128xf32> to vector<32x128xf32>
    %cst = arith.constant dense<0.000000e+00> : vector<16x128xf32>
    %6 = tpu.matmul %3, %5, %cst {dimension_numbers = #tpu.dot_dimension_numbers<[1], [0], [0], [1], [0, 0, 1, 1], [], []>} : vector<16x32xf32>, vector<32x128xf32>, vector<16x128xf32> -> vector<16x128xf32>
    %7 = vector.extract_strided_slice %6 {offsets = [0, 0], sizes = [16, 64], strides = [1, 1]} : vector<16x128xf32> to vector<16x64xf32>
    %8 = vector.extract_strided_slice %6 {offsets = [0, 64], sizes = [16, 64], strides = [1, 1]} : vector<16x128xf32> to vector<16x64xf32>
    %9 = arith.negf %7 : vector<16x64xf32>
    %10 = math.exp %9 : vector<16x64xf32>
    %cst_5 = arith.constant 1.000000e+00 : f32
    %11 = vector.broadcast %cst_5 : f32 to vector<16x64xf32>
    %12 = arith.addf %11, %10 : vector<16x64xf32>
    %13 = arith.divf %11, %12 : vector<16x64xf32>
    %14 = arith.mulf %7, %13 : vector<16x64xf32>
    %15 = arith.mulf %14, %8 : vector<16x64xf32>
    %c0_6 = arith.constant 0 : index
    %c0_7 = arith.constant 0 : index
    %16 = vector.load %arg7[%c0_6, %c0_7] : memref<16x32xf32, #tpu.memory_space<vmem>>, vector<16x32xf32>
    %c0_8 = arith.constant 0 : index
    %c0_9 = arith.constant 0 : index
    %c0_10 = arith.constant 0 : index
    %17 = vector.load %arg5[%c0_8, %c0_9, %c0_10] : memref<1x64x32xf32, #tpu.memory_space<vmem>>, vector<1x64x32xf32>
    %18 = vector.shape_cast %17 : vector<1x64x32xf32> to vector<64x32xf32>
    %cst_11 = arith.constant dense<0.000000e+00> : vector<16x32xf32>
    %19 = tpu.matmul %15, %18, %cst_11 {dimension_numbers = #tpu.dot_dimension_numbers<[1], [0], [0], [1], [0, 0, 1, 1], [], []>} : vector<16x64xf32>, vector<64x32xf32>, vector<16x32xf32> -> vector<16x32xf32>
    %20 = arith.addf %16, %19 : vector<16x32xf32>
    %c0_12 = arith.constant 0 : index
    %c0_13 = arith.constant 0 : index
    %21 = vector.load %arg7[%c0_12, %c0_13] : memref<16x32xf32, #tpu.memory_space<vmem>>, vector<16x32xf32>
    tpu.vector_store %arg7[%c0_12, %c0_13], %20 {strides = array<i32>} : memref<16x32xf32, #tpu.memory_space<vmem>>, vector<16x32xf32>,
    %c0_i32_14 = arith.constant 0 : i32
    %22 = arith.cmpi eq, %arg1, %c0_i32_14 : i32
    %23 = arith.extui %22 : i1 to i32
    %c0_i32_15 = arith.constant 0 : i32
    %24 = arith.cmpi ne, %23, %c0_i32_15 : i32
    scf.if %24 {
      %25 = arith.mulf %3, %3 : vector<16x32xf32>
      %cst_16 = arith.constant dense<0.000000e+00> : vector<16xf32>
      %26 = vector.multi_reduction <add>, %25, %cst_16 [1] : vector<16x32xf32> to vector<16xf32>
      %27 = vector.shape_cast %26 : vector<16xf32> to vector<16x1xf32>
      %28 = math.sqrt %27 : vector<16x1xf32>
      %cst_17 = arith.constant 9.99999993E-9 : f32
      %29 = vector.broadcast %cst_17 : f32 to vector<16x1xf32>
      %30 = arith.addf %28, %29 : vector<16x1xf32>
      %31 = vector.broadcast %30 : vector<16x1xf32> to vector<16x32xf32>
      %32 = arith.divf %3, %31 : vector<16x32xf32>
      %c0_18 = arith.constant 0 : index
      %c0_19 = arith.constant 0 : index
      %33 = vector.load %arg7[%c0_18, %c0_19] : memref<16x32xf32, #tpu.memory_space<vmem>>, vector<16x32xf32>
      %34 = arith.mulf %33, %32 : vector<16x32xf32>
      %c0_20 = arith.constant 0 : index
      %35 = memref.load %arg2[%c0_20] : memref<1xf32, #tpu.memory_space<smem>>
      %36 = vector.broadcast %35 : f32 to vector<16x32xf32>
      %37 = arith.mulf %34, %36 : vector<16x32xf32>
      %c0_21 = arith.constant 0 : index
      %c0_22 = arith.constant 0 : index
      %38 = vector.load %arg6[%c0_21, %c0_22] : memref<16x32xf32, #tpu.memory_space<vmem>>, vector<16x32xf32>
      tpu.vector_store %arg6[%c0_21, %c0_22], %37 {strides = array<i32>} : memref<16x32xf32, #tpu.memory_space<vmem>>, vector<16x32xf32>,
    } else {
    }
    return
  }
  func.func @transform_0(%arg0: i32, %arg1: i32) -> i32 {
    %c0_i32 = arith.constant 0 : i32
    %c0_i32_0 = arith.constant 0 : i32
    return %c0_i32 : i32
  }
  func.func @transform_1(%arg0: i32, %arg1: i32) -> (i32, i32) {
    %c0_i32 = arith.constant 0 : i32
    %c0_i32_0 = arith.constant 0 : i32
    return %arg0, %c0_i32 : i32, i32
  }
  func.func @transform_2(%arg0: i32, %arg1: i32) -> (i32, i32, i32) {
    %c0_i32 = arith.constant 0 : i32
    %c0_i32_0 = arith.constant 0 : i32
    %c0_i32_1 = arith.constant 0 : i32
    return %arg1, %c0_i32, %c0_i32_0 : i32, i32, i32
  }
  func.func @transform_3(%arg0: i32, %arg1: i32) -> (i32, i32, i32) {
    %c0_i32 = arith.constant 0 : i32
    %c0_i32_0 = arith.constant 0 : i32
    %c0_i32_1 = arith.constant 0 : i32
    return %arg1, %c0_i32, %c0_i32_0 : i32, i32, i32
  }
  func.func @transform_4(%arg0: i32, %arg1: i32) -> (i32, i32) {
    %c0_i32 = arith.constant 0 : i32
    %c0_i32_0 = arith.constant 0 : i32
    return %arg0, %c0_i32 : i32, i32
  }
}

</mosaic_0001>

<llo_original>
// kernel: hyperbolic_ffn.1
$region0: #{hyperbolic_ffn.1}
  #allocation0 [shape = 'u32[]', space=smem, size = 0x4, offset = 0x4, fixed_abs, tag = 'smem constant byte address 0x4 - core index']
  #allocation1 [shape = 'u32[144,128]{1,0:T(1,128)}', space=vmem, size = 0x12000, scoped, tag = 'internal scratch']
  #allocation2 [shape = 'f32[16,32]{1,0:T(8,128)}', space=vmem, size = 0x2000, scoped, tag = 'scratch operand']
  #allocation3 [shape = 'f32[1]{0:T(128)S(6)}', space=smem, size = 0x200, scoped, tag = 'scoped memory for hyperbolic_ffn.1']
  %s0 = inlined_call_operand.<no memory space> [shape: f32[1], index: 0, kind: input, shape index: {}]
  %s1 = inlined_call_operand.vmem [shape: f32[16,32], index: 1, kind: input, shape index: {}]
  %s2 = inlined_call_operand.vmem [shape: f32[1,32,128], index: 2, kind: input, shape index: {}]
  %s3 = inlined_call_operand.vmem [shape: f32[1,64,32], index: 3, kind: input, shape index: {}]
  %s4 = inlined_call_operand.hbm [shape: f32[16,32], index: 4, kind: output, shape index: {}]
  %s5 = sld [smem:[#allocation0]]
  $region34: #{hyperbolic_ffn.1} parent=0
    _
  %s7 = ssub.s32 1, %s5
  %s8 = scalar_select 0, %s7, %s5
  %9 = sst [smem:[#allocation3]] %s0
  $region1: #{hyperbolic_ffn.1} parent=0
    #allocation4 [shape = 'u8[8192]{0}', space=vmem, size = 0x2000, scoped, tag = 'output window, operand 0, single buffered']
    #allocation5 [shape = 's32[1]{0}', space=sflag, size = 0x4, scoped, tag = 'scoped memory for hyperbolic_ffn.1']
    %10 = vsyncpa [#allocation5], 0
    // Predicated region
    $region2: #{hyperbolic_ffn.1} parent=1 // pred_check
      _
    $region3: #{hyperbolic_ffn.1} parent=1 // pred_check_branch
      %12 = sbr.rel (0) target = $region5
    $region4: #{hyperbolic_ffn.1} parent=1 // pred_region
      _
    $region5: #{hyperbolic_ffn.1} parent=1 // pred_fallthru
      _
    // Predicated region
    $region6: #{hyperbolic_ffn.1} parent=1 // pred_check
      _
    $region7: #{hyperbolic_ffn.1} parent=1 // pred_check_branch
      %14 = sbr.rel (0) target = $region9
    $region8: #{hyperbolic_ffn.1} parent=1 // pred_region
      _
    $region9: #{hyperbolic_ffn.1} parent=1 // pred_fallthru
      _
    // Predicated region
    $region10: #{hyperbolic_ffn.1} parent=1 // pred_check
      _
    $region11: #{hyperbolic_ffn.1} parent=1 // pred_check_branch
      %16 = sbr.rel (0) target = $region13
    $region12: #{hyperbolic_ffn.1} parent=1 // pred_region
      _
    $region13: #{hyperbolic_ffn.1} parent=1 // pred_fallthru
      _
    // Predicated region
    $region14: #{hyperbolic_ffn.1} parent=1 // pred_check
      _
    $region15: #{hyperbolic_ffn.1} parent=1 // pred_check_branch
      %18 = sbr.rel (0) target = $region17
    $region16: #{hyperbolic_ffn.1} parent=1 // pred_region
      _
    $region17: #{hyperbolic_ffn.1} parent=1 // pred_fallthru
      _
    %p19 = scmp.eq.s32.totalorder 0, 0
    // Predicated region
    $region18: #{hyperbolic_ffn.1} parent=1 // pred_check
      %p20 = pneg %p19
    $region19: #{hyperbolic_ffn.1} parent=1 // pred_check_branch
      %22 = sbr.rel (%p20) target = $region21
    $region20: #{hyperbolic_ffn.1} parent=1 // pred_region
      %vm23 = vcmask 261120
      %24 = vst.msk [vmem:[#allocation2] sm:$0xff] %vm23, 0.0
      %25 = vst.msk [vmem:[#allocation2 + $0x8] sm:$0xff] %vm23, 0.0
    $region21: #{hyperbolic_ffn.1} parent=1 // pred_fallthru
      _
    %v26 = vld [vmem:[%s1] sm:$0xff]
    %v27 = vld [vmem:[%s1 + $0x8] sm:$0xff]
    %v28 = vld [vmem:[%s2] sm:$0xff]
    %v29 = vld [vmem:[%s2 + $0x8] sm:$0xff]
    %v30 = vld [vmem:[%s2 + $0x10] sm:$0xff]
    %v31 = vld [vmem:[%s2 + $0x18] sm:$0xff]
    %vm32 = vcmask 261120
    %v34 = vsel %vm32, %v26, 0
    %v37 = vsel %vm32, %v27, 0
    %39 = vmatprep.subr.mxu0 0.0
    %40 = vmatpush1.msra.mxu0 0.0
    %41 = vmatprep.subr.mxu0 0.0
    %42 = vmatpush1.msra.mxu0 0.0
    %43 = vmatprep.subr.mxu0 0.0
    %44 = vmatpush1.msra.mxu0 0.0
    %45 = vmatprep.subr.mxu0 0.0
    %46 = vmatpush1.msra.mxu0 0.0
    %47 = vmatprep.subr.mxu0 0.0
    %48 = vmatpush1.msra.mxu0 0.0
    %49 = vmatprep.subr.mxu0 0.0
    %50 = vmatpush1.msra.mxu0 0.0
    %51 = vmatprep.subr.mxu0 0.0
    %52 = vmatpush1.msra.mxu0 0.0
    %53 = vmatprep.subr.mxu0 0.0
    %54 = vmatpush1.msra.mxu0 0.0
    %55 = vmatprep.subr.mxu0 0.0
    %56 = vmatpush1.msra.mxu0 0.0
    %57 = vmatprep.subr.mxu0 0.0
    %58 = vmatpush1.msra.mxu0 0.0
    %59 = vmatprep.subr.mxu0 0.0
    %60 = vmatpush1.msra.mxu0 0.0
    %61 = vmatprep.subr.mxu0 0.0
    %62 = vmatpush1.msra.mxu0 0.0
    %63 = vmatprep.subr.mxu0 0.0
    %64 = vmatpush1.msra.mxu0 %v31
    %65 = vmatprep.subr.mxu0 0.0
    %66 = vmatpush1.msra.mxu0 %v30
    %67 = vmatprep.subr.mxu0 0.0
    %68 = vmatpush1.msra.mxu0 %v29
    %69 = vmatprep.subr.mxu0 0.0
    %70 = vmatpush1.msra.mxu0 %v28
    %71 = vmatprep.subr.mxu0 0.0
    %72 = vmatpush2.msra.mxu0 0.0
    %73 = vmatprep.subr.mxu0 0.0
    %74 = vmatpush2.msra.mxu0 0.0
    %75 = vmatprep.subr.mxu0 0.0
    %76 = vmatpush2.msra.mxu0 0.0
    %77 = vmatprep.subr.mxu0 0.0
    %78 = vmatpush2.msra.mxu0 0.0
    %79 = vmatprep.subr.mxu0 0.0
    %80 = vmatpush2.msra.mxu0 0.0
    %81 = vmatprep.subr.mxu0 0.0
    %82 = vmatpush2.msra.mxu0 0.0
    %83 = vmatprep.subr.mxu0 0.0
    %84 = vmatpush2.msra.mxu0 0.0
    %85 = vmatprep.subr.mxu0 0.0
    %86 = vmatpush2.msra.mxu0 0.0
    %87 = vmatprep.subr.mxu0 0.0
    %88 = vmatpush2.msra.mxu0 0.0
    %89 = vmatprep.subr.mxu0 0.0
    %90 = vmatpush2.msra.mxu0 0.0
    %91 = vmatprep.subr.mxu0 0.0
    %92 = vmatpush2.msra.mxu0 0.0
    %93 = vmatprep.subr.mxu0 0.0
    %94 = vmatpush2.msra.mxu0 0.0
    %95 = vmatprep.subr.mxu0 0.0
    %96 = vmatpush2.msra.mxu0 0.0
    %97 = vmatprep.subr.mxu0 0.0
    %98 = vmatpush2.msra.mxu0 0.0
    %99 = vmatprep.subr.mxu0 0.0
    %100 = vmatpush2.msra.mxu0 0.0
    %101 = vmatprep.subr.mxu0 0.0
    %102 = vmatpush2.msra.mxu0 0.0
    %103 = vmatprep.mubr.f32.mxu0 0.0
    %104 = vmatmul.mubr.f32.gmra.mxu0 %v34
    %v105 = vpop.f32.mrf.mxu0
    %v106 = vadd.f32 0.0, %v105
    %v107 = vpop.f32.mrf.mxu0
    %108 = vmatprep.mubr.f32.mxu0 0.0
    %109 = vmatmul.mubr.f32.gmra.mxu0 %v37
    %v110 = vpop.f32.mrf.mxu0
    %v111 = vadd.f32 0.0, %v110
    %v112 = vpop.f32.mrf.mxu0
    %113 = vdwg.mxu0
    %v114 = vxor.u32 %v106, 2147483648
    %v115 = vxor.u32 %v111, 2147483648
    %v116 = vmul.f32 %v114, 1.442695
    %v117 = vpow.pop %v116
    %v118 = vmul.f32 %v115, 1.442695
    %v119 = vpow.pop %v118
    %v120 = vadd.f32 %v117, 1.0
    %v121 = vadd.f32 %v119, 1.0
    %v122 = vrcp.pop %v120
    %v123 = vmul.f32 1.0, %v122
    %v124 = vrcp.pop %v121
    %v125 = vmul.f32 1.0, %v124
    %v126 = vmul.f32 %v106, %v123
    %v127 = vmul.f32 %v111, %v125
    %130 = vrot.lane.b32.xlu0 %v106, 64
    %v131 = vpop.permute.xlu0 %130
    %132 = vrot.lane.b32.xlu0 %v111, 64
    %v133 = vpop.permute.xlu0 %132
    %v136 = vmul.f32 %v126, %v131
    %v137 = vmul.f32 %v127, %v133
    %v138 = vld [vmem:[#allocation2] sm:$0xff]
    %v139 = vld [vmem:[#allocation2 + $0x8] sm:$0xff]
    %v140 = vld [vmem:[%s3] sm:$0xff]
    %v141 = vld [vmem:[%s3 + $0x8] sm:$0xff]
    %v142 = vld [vmem:[%s3 + $0x10] sm:$0xff]
    %v143 = vld [vmem:[%s3 + $0x18] sm:$0xff]
    %v144 = vld [vmem:[%s3 + $0x20] sm:$0xff]
    %v145 = vld [vmem:[%s3 + $0x28] sm:$0xff]
    %v146 = vld [vmem:[%s3 + $0x30] sm:$0xff]
    %v147 = vld [vmem:[%s3 + $0x38] sm:$0xff]
    %vm148 = vcmask 523264
    %v150 = vsel %vm148, %v136, 0
    %v153 = vsel %vm148, %v137, 0
    %155 = vmatprep.subr.mxu0 0.0
    %156 = vmatpush1.msra.mxu0 0.0
    %157 = vmatprep.subr.mxu0 0.0
    %158 = vmatpush1.msra.mxu0 0.0
    %159 = vmatprep.subr.mxu0 0.0
    %160 = vmatpush1.msra.mxu0 0.0
    %161 = vmatprep.subr.mxu0 0.0
    %162 = vmatpush1.msra.mxu0 0.0
    %163 = vmatprep.subr.mxu0 0.0
    %164 = vmatpush1.msra.mxu0 0.0
    %165 = vmatprep.subr.mxu0 0.0
    %166 = vmatpush1.msra.mxu0 0.0
    %167 = vmatprep.subr.mxu0 0.0
    %168 = vmatpush1.msra.mxu0 0.0
    %169 = vmatprep.subr.mxu0 0.0
    %170 = vmatpush1.msra.mxu0 0.0
    %171 = vmatprep.subr.mxu0 0.0
    %172 = vmatpush1.msra.mxu0 %v147
    %173 = vmatprep.subr.mxu0 0.0
    %174 = vmatpush1.msra.mxu0 %v146
    %175 = vmatprep.subr.mxu0 0.0
    %176 = vmatpush1.msra.mxu0 %v145
    %177 = vmatprep.subr.mxu0 0.0
    %178 = vmatpush1.msra.mxu0 %v144
    %179 = vmatprep.subr.mxu0 0.0
    %180 = vmatpush1.msra.mxu0 %v143
    %181 = vmatprep.subr.mxu0 0.0
    %182 = vmatpush1.msra.mxu0 %v142
    %183 = vmatprep.subr.mxu0 0.0
    %184 = vmatpush1.msra.mxu0 %v141
    %185 = vmatprep.subr.mxu0 0.0
    %186 = vmatpush1.msra.mxu0 %v140
    %187 = vmatprep.subr.mxu0 0.0
    %188 = vmatpush2.msra.mxu0 0.0
    %189 = vmatprep.subr.mxu0 0.0
    %190 = vmatpush2.msra.mxu0 0.0
    %191 = vmatprep.subr.mxu0 0.0
    %192 = vmatpush2.msra.mxu0 0.0
    %193 = vmatprep.subr.mxu0 0.0
    %194 = vmatpush2.msra.mxu0 0.0
    %195 = vmatprep.subr.mxu0 0.0
    %196 = vmatpush2.msra.mxu0 0.0
    %197 = vmatprep.subr.mxu0 0.0
    %198 = vmatpush2.msra.mxu0 0.0
    %199 = vmatprep.subr.mxu0 0.0
    %200 = vmatpush2.msra.mxu0 0.0
    %201 = vmatprep.subr.mxu0 0.0
    %202 = vmatpush2.msra.mxu0 0.0
    %203 = vmatprep.subr.mxu0 0.0
    %204 = vmatpush2.msra.mxu0 0.0
    %205 = vmatprep.subr.mxu0 0.0
    %206 = vmatpush2.msra.mxu0 0.0
    %207 = vmatprep.subr.mxu0 0.0
    %208 = vmatpush2.msra.mxu0 0.0
    %209 = vmatprep.subr.mxu0 0.0
    %210 = vmatpush2.msra.mxu0 0.0
    %211 = vmatprep.subr.mxu0 0.0
    %212 = vmatpush2.msra.mxu0 0.0
    %213 = vmatprep.subr.mxu0 0.0
    %214 = vmatpush2.msra.mxu0 0.0
    %215 = vmatprep.subr.mxu0 0.0
    %216 = vmatpush2.msra.mxu0 0.0
    %217 = vmatprep.subr.mxu0 0.0
    %218 = vmatpush2.msra.mxu0 0.0
    %219 = vmatprep.mubr.f32.mxu0 0.0
    %220 = vmatmul.mubr.f32.gmra.mxu0 %v150
    %v221 = vpop.f32.mrf.mxu0
    %v222 = vadd.f32 0.0, %v221
    %v223 = vpop.f32.mrf.mxu0
    %224 = vmatprep.mubr.f32.mxu0 0.0
    %225 = vmatmul.mubr.f32.gmra.mxu0 %v153
    %v226 = vpop.f32.mrf.mxu0
    %v227 = vadd.f32 0.0, %v226
    %v228 = vpop.f32.mrf.mxu0
    %229 = vdwg.mxu0
    %v230 = vadd.f32 %v138, %v222
    %v231 = vadd.f32 %v139, %v227
    %232 = vst.msk [vmem:[#allocation2] sm:$0xff] %vm32, %v230
    %233 = vst.msk [vmem:[#allocation2 + $0x8] sm:$0xff] %vm32, %v231
    // Predicated region
    $region22: #{hyperbolic_ffn.1} parent=1 // pred_check
      %p234 = pneg %p19
    $region23: #{hyperbolic_ffn.1} parent=1 // pred_check_branch
      %236 = sbr.rel (%p234) target = $region25
    $region24: #{hyperbolic_ffn.1} parent=1 // pred_region
      %v237 = vmul.f32 %v26, %v26
      %v238 = vmul.f32 %v27, %v27
      %v239 = vsel %vm32, %v237, 0.0
      %240 = vadd.xlane.f32.xlu0 %v239
      %v241 = vpop.xlane.xlu0 %240
      %v242 = vsel %vm32, %v238, 0.0
      %243 = vadd.xlane.f32.xlu0 %v242
      %v244 = vpop.xlane.xlu0 %243
      %v245 = vrsqrt.pop %v241
      %v246 = vmul.f32 %v241, %v245
      %vm247 = vcmp.eq.f32.partialorder %v241, inf
      %v248 = vsel %vm247, %v241, %v246
      %vm249 = vcmp.eq.f32.partialorder %v241, 0.0
      %v250 = vand.u32 %v241, 2147483648
      %v251 = vsel %vm249, %v250, %v248
      %v252 = vrsqrt.pop %v244
      %v253 = vmul.f32 %v244, %v252
      %vm254 = vcmp.eq.f32.partialorder %v244, inf
      %v255 = vsel %vm254, %v244, %v253
      %vm256 = vcmp.eq.f32.partialorder %v244, 0.0
      %v257 = vand.u32 %v244, 2147483648
      %v258 = vsel %vm256, %v257, %v255
      %v259 = vadd.f32 %v251, 1e-08
      %v260 = vadd.f32 %v258, 1e-08
      %v261 = vrcp.pop %v259
      %v262 = vmul.f32 %v26, %v261
      %v263 = vrcp.pop %v260
      %v264 = vmul.f32 %v27, %v263
      %v265 = vld [vmem:[#allocation2] sm:$0xff]
      %v266 = vld [vmem:[#allocation2 + $0x8] sm:$0xff]
      %v267 = vmul.f32 %v265, %v262
      %v268 = vmul.f32 %v266, %v264
      %s269 = sld [smem:[#allocation3]]
      %v270 = vstv %s269
      %v271 = vmul.f32 %v267, %v270
      %v272 = vmul.f32 %v268, %v270
      %273 = vst.msk [vmem:[#allocation4] sm:$0xff] %vm32, %v271
      %274 = vst.msk [vmem:[#allocation4 + $0x8] sm:$0xff] %vm32, %v272
    $region25: #{hyperbolic_ffn.1} parent=1 // pred_fallthru
      _
    // Predicated region
    $region26: #{hyperbolic_ffn.1} parent=1 // pred_check
      _
    $region27: #{hyperbolic_ffn.1} parent=1 // pred_check_branch
      %276 = sbr.rel (0) target = $region29
    $region28: #{hyperbolic_ffn.1} parent=1 // pred_region
      %s278 = ssub.s32 256, 256
      %279 = vsyncadd [#allocation5], %s278
      %s280 = sshll.u32 [#allocation4], 4
      %s281 = int_to_ptr.vmem [resolvable:$true] %s280
      %286 = dma.vmem_to_hbm [thread:$0]  %s281, 256, %s4, [#allocation5], 128, 128, 8
    $region29: #{hyperbolic_ffn.1} parent=1 // pred_fallthru
      _
    // Predicated region
    $region30: #{hyperbolic_ffn.1} parent=1 // pred_check
      _
    $region31: #{hyperbolic_ffn.1} parent=1 // pred_check_branch
      %288 = sbr.rel (0) target = $region33
    $region32: #{hyperbolic_ffn.1} parent=1 // pred_region
      %289 = dma.done [#allocation5], 256
    $region33: #{hyperbolic_ffn.1} parent=1 // pred_fallthru
      _
    %290 = vsyncpa [#allocation5], 1

</llo_original>
